<compile_context>
chip_gen: v7x
topology: tpu7x:2x2x1
jax: 0.10.0
libtpu: 0.0.40
codegen_flags: <defaults>
</compile_context>

<pallas_src>
import jax
import jax.numpy as jnp
from jax import lax
from jax.experimental import pallas as pl
from jax.experimental.pallas import tpu as pltpu

EPS = 0.01
LANES = 128
SUBLANES = 8
TARGET_BLOCK_BYTES = 4 * 1024 * 1024   # 4 MiB / input block; x2 inputs x2 bufs = 16 MiB
VMEM_LIMIT_BYTES = 32 * 1024 * 1024    # safe on v5e/v6e/v7x, covers the pipelined buffers


def _make_kernel(row_tile, n_blocks, tail_rows):
    """Streaming partial-sum kernel.

    row_tile  : rows (of 128 lanes) per grid step (static Python int).
    n_blocks  : grid extent along the single "arbitrary" reduction axis.
    tail_rows : number of valid rows in the last block, or None if all blocks
                are full (then no masking code is emitted at all).
    """

    def _fold(d):
        # Fold the (row_tile, 128) block onto one (8, 128) vreg: pure VPU adds.
        if row_tile % SUBLANES == 0:
            return d.reshape(-1, SUBLANES, LANES).sum(axis=0)
        # Tiny single-block case where rows is not a multiple of 8.
        rowsum = d.sum(axis=0, keepdims=True)                       # (1, 128)
        return jnp.concatenate(
            [rowsum, jnp.zeros((SUBLANES - 1, LANES), jnp.float32)], axis=0)

    def _accum(s_ref, t_ref, out_ref, valid_rows):
        s = s_ref[...].astype(jnp.float32)
        t = t_ref[...].astype(jnp.float32)
        inv = pl.reciprocal(jnp.abs(t) + EPS, approx=False)   # EUP, frees VALU
        d = jnp.abs(s - t) * inv
        if valid_rows is not None:
            rows = lax.broadcasted_iota(jnp.int32, d.shape, 0)
            d = jnp.where(rows < valid_rows, d, 0.0)          # mask stale tail
        out_ref[...] += _fold(d)

    def kernel(s_ref, t_ref, out_ref):
        i = pl.program_id(0)

        @pl.when(i == 0)
        def _():
            out_ref[...] = jnp.zeros_like(out_ref)

        if tail_rows is None:
            _accum(s_ref, t_ref, out_ref, None)
        else:
            @pl.when(i < n_blocks - 1)      # steady state: mask-free
            def _():
                _accum(s_ref, t_ref, out_ref, None)

            @pl.when(i == n_blocks - 1)     # ragged last block: row mask
            def _():
                _accum(s_ref, t_ref, out_ref, tail_rows)

    return kernel


def relative_error(src, target):
    assert src.shape == target.shape, "src/target must have the same shape"
    n_total = int(src.size)

    # Lane-dense flat view in the NATIVE dtype; upcast to f32 happens on the
    # VPU inside the kernel so HBM traffic is exactly one read of each input.
    flat_s = jnp.ravel(src)
    flat_t = jnp.ravel(target)

    rem = n_total % LANES
    if rem:
        # TODO(synk): rare path (element count not a multiple of 128 lanes):
        # this is the only case that still materializes a padded copy.
        pad = LANES - rem
        flat_s = jnp.pad(flat_s, (0, pad))
        flat_t = jnp.pad(flat_t, (0, pad))

    rows = flat_s.size // LANES
    s2 = flat_s.reshape(rows, LANES)   # zero-copy reshape (row-major contiguous)
    t2 = flat_t.reshape(rows, LANES)

    itemsize = jnp.dtype(src.dtype).itemsize
    pack = max(1, 4 // itemsize)                 # f32:1  bf16:2  int8/fp8:4
    sublane_align = SUBLANES * pack              # 8 / 16 / 32
    base_rows = TARGET_BLOCK_BYTES // (LANES * itemsize)
    base_rows = max(sublane_align, (base_rows // sublane_align) * sublane_align)

    if rows <= base_rows:
        # One block covering the whole array (full-extent block is always
        # legal); no masking needed.
        row_tile, n_blocks, tail_rows = rows, 1, None
    else:
        row_tile = base_rows
        n_blocks = pl.cdiv(rows, row_tile)
        last = rows - (n_blocks - 1) * row_tile
        tail_rows = None if last == row_tile else last

    kernel = _make_kernel(row_tile, n_blocks, tail_rows)

    partials = pl.pallas_call(
        kernel,
        out_shape=jax.ShapeDtypeStruct((SUBLANES, LANES), jnp.float32),
        grid_spec=pltpu.PrefetchScalarGridSpec(
            num_scalar_prefetch=0,
            grid=(n_blocks,),
            in_specs=[
                pl.BlockSpec((row_tile, LANES), lambda i: (i, 0)),
                pl.BlockSpec((row_tile, LANES), lambda i: (i, 0)),
            ],
            # Same block index across the reduction axis -> resident accumulator.
            out_specs=pl.BlockSpec((SUBLANES, LANES), lambda i: (0, 0)),
        ),
        compiler_params=pltpu.CompilerParams(
            dimension_semantics=("arbitrary",),
            vmem_limit_bytes=VMEM_LIMIT_BYTES,
        ),
        cost_estimate=pl.CostEstimate(
            flops=5 * n_total,
            transcendentals=n_total,
            bytes_accessed=2 * n_total * itemsize + SUBLANES * LANES * 4,
        ),
    )(s2, t2)

    # Single tiny cross-lane reduce + normalization by the TRUE element count
    # (padded / masked elements contribute exactly 0 to the sum).
    return jnp.sum(partials) / jnp.float32(n_total)


def relative_error_ref(src, target):
    diff = jnp.abs(src - target) / (jnp.abs(target) + EPS)
    return jnp.mean(diff)


if __name__ == "__main__":
    key = jax.random.PRNGKey(0)
    k1, k2 = jax.random.split(key)
    # Small NCHW-like shapes, consistent with an elementwise loss module.
    src = jax.random.normal(k1, (2, 4, 16, 16), dtype=jnp.float32)
    target = jax.random.normal(k2, (2, 4, 16, 16), dtype=jnp.float32)

    out = relative_error(src, target)
    jax.block_until_ready(out)

    ref = relative_error_ref(src, target)
    assert jnp.allclose(out, ref, rtol=1e-5, atol=1e-6), (out, ref)
    print("KERNEL_OK")
</pallas_src>

<mosaic_0001>
module attributes {stable_mosaic.version = 11 : i64} {
  func.func @kernel(%arg0: i32, %arg1: memref<16x128xf32, #tpu.memory_space<vmem>>, %arg2: memref<16x128xf32, #tpu.memory_space<vmem>>, %arg3: memref<8x128xf32, #tpu.memory_space<vmem>>) attributes {dimension_semantics = [#tpu.dimension_semantics<arbitrary>], iteration_bounds = array<i64: 1>, scalar_prefetch = 0 : i64, scratch_operands = 0 : i64, tpu.core_type = #tpu.core_type<tc>, window_params = [{transform_indices = @transform_0, window_bounds = array<i64: 16, 128>}, {transform_indices = @transform_1, window_bounds = array<i64: 16, 128>}, {pipeline_mode = #tpu.pipeline_mode<synchronous>, transform_indices = @transform_2, window_bounds = array<i64: 8, 128>}]} {
    %c0_i32 = arith.constant 0 : i32
    %0 = arith.cmpi eq, %arg0, %c0_i32 : i32
    %1 = arith.extui %0 : i1 to i32
    %c0_i32_0 = arith.constant 0 : i32
    %2 = arith.cmpi ne, %1, %c0_i32_0 : i32
    scf.if %2 {
      %cst_9 = arith.constant 0.000000e+00 : f32
      %17 = vector.broadcast %cst_9 : f32 to vector<8x128xf32>
      %c0_10 = arith.constant 0 : index
      %c0_11 = arith.constant 0 : index
      %18 = vector.load %arg3[%c0_10, %c0_11] : memref<8x128xf32, #tpu.memory_space<vmem>>, vector<8x128xf32>
      tpu.vector_store %arg3[%c0_10, %c0_11], %17 {strides = array<i32>} : memref<8x128xf32, #tpu.memory_space<vmem>>, vector<8x128xf32>,
    } else {
    }
    %c0 = arith.constant 0 : index
    %c0_1 = arith.constant 0 : index
    %3 = vector.load %arg1[%c0, %c0_1] : memref<16x128xf32, #tpu.memory_space<vmem>>, vector<16x128xf32>
    %c0_2 = arith.constant 0 : index
    %c0_3 = arith.constant 0 : index
    %4 = vector.load %arg2[%c0_2, %c0_3] : memref<16x128xf32, #tpu.memory_space<vmem>>, vector<16x128xf32>
    %5 = math.absf %4 : vector<16x128xf32>
    %cst = arith.constant 0.00999999977 : f32
    %6 = vector.broadcast %cst : f32 to vector<16x128xf32>
    %7 = arith.addf %5, %6 : vector<16x128xf32>
    %8 = tpu.reciprocal %7 : vector<16x128xf32> -> vector<16x128xf32>
    %9 = arith.subf %3, %4 : vector<16x128xf32>
    %10 = math.absf %9 : vector<16x128xf32>
    %11 = arith.mulf %10, %8 : vector<16x128xf32>
    %c0_4 = arith.constant 0 : index
    %c0_5 = arith.constant 0 : index
    %12 = vector.load %arg3[%c0_4, %c0_5] : memref<8x128xf32, #tpu.memory_space<vmem>>, vector<8x128xf32>
    %13 = vector.shape_cast %11 : vector<16x128xf32> to vector<2x8x128xf32>
    %cst_6 = arith.constant dense<0.000000e+00> : vector<8x128xf32>
    %14 = vector.multi_reduction <add>, %13, %cst_6 [0] : vector<2x8x128xf32> to vector<8x128xf32>
    %15 = arith.addf %12, %14 : vector<8x128xf32>
    %c0_7 = arith.constant 0 : index
    %c0_8 = arith.constant 0 : index
    %16 = vector.load %arg3[%c0_7, %c0_8] : memref<8x128xf32, #tpu.memory_space<vmem>>, vector<8x128xf32>
    tpu.vector_store %arg3[%c0_7, %c0_8], %15 {strides = array<i32>} : memref<8x128xf32, #tpu.memory_space<vmem>>, vector<8x128xf32>,
    return
  }
  func.func @transform_0(%arg0: i32) -> (i32, i32) {
    %c0_i32 = arith.constant 0 : i32
    %c0_i32_0 = arith.constant 0 : i32
    return %arg0, %c0_i32 : i32, i32
  }
  func.func @transform_1(%arg0: i32) -> (i32, i32) {
    %c0_i32 = arith.constant 0 : i32
    %c0_i32_0 = arith.constant 0 : i32
    return %arg0, %c0_i32 : i32, i32
  }
  func.func @transform_2(%arg0: i32) -> (i32, i32) {
    %c0_i32 = arith.constant 0 : i32
    %c0_i32_0 = arith.constant 0 : i32
    %c0_i32_1 = arith.constant 0 : i32
    return %c0_i32, %c0_i32_0 : i32, i32
  }
}

</mosaic_0001>

<llo_original>
// kernel: tpu_custom_call.1
$region0: #{tpu_custom_call.1}
  #allocation0 [shape = 'u32[]', space=smem, size = 0x4, offset = 0x4, fixed_abs, tag = 'smem constant byte address 0x4 - core index']
  #allocation1 [shape = 'u32[144,128]{1,0:T(1,128)}', space=vmem, size = 0x12000, scoped, tag = 'internal scratch']
  %s0 = inlined_call_operand.hbm [shape: f32[16,128], index: 0, kind: input, shape index: {}]
  %s1 = inlined_call_operand.hbm [shape: f32[16,128], index: 1, kind: input, shape index: {}]
  %s2 = inlined_call_operand.hbm [shape: f32[8,128], index: 2, kind: output, shape index: {}]
  %s3 = sld [smem:[#allocation0]]
  $region30: #{tpu_custom_call.1} parent=0
    _
  %s5 = ssub.s32 1, %s3
  %s6 = scalar_select 0, %s5, %s3
  $region1: #{tpu_custom_call.1} parent=0
    #allocation2 [shape = 'u8[8192]{0}', space=vmem, size = 0x2000, scoped, tag = 'input window, operand 0, single buffered']
    #allocation3 [shape = 's32[1]{0}', space=sflag, size = 0x4, scoped, tag = 'scoped memory for tpu_custom_call.1']
    #allocation4 [shape = 's32[1]{0}', space=sflag, size = 0x4, scoped, tag = 'scoped memory for tpu_custom_call.1']
    #allocation5 [shape = 'u8[8192]{0}', space=vmem, size = 0x2000, scoped, tag = 'input window, operand 1, single buffered']
    #allocation6 [shape = 's32[1]{0}', space=sflag, size = 0x4, scoped, tag = 'scoped memory for tpu_custom_call.1']
    #allocation7 [shape = 'u8[4096]{0}', space=vmem, size = 0x1000, scoped, tag = 'output window, operand 0, single buffered']
    %7 = vsyncpa [#allocation3], 0
    %8 = vsyncpa [#allocation6], 0
    %9 = vsyncpa [#allocation4], 0
    // Predicated region
    $region2: #{tpu_custom_call.1} parent=1 // pred_check
      _
    $region3: #{tpu_custom_call.1} parent=1 // pred_check_branch
      %11 = sbr.rel (0) target = $region5
    $region4: #{tpu_custom_call.1} parent=1 // pred_region
      %s13 = ssub.s32 256, 256
      %14 = vsyncadd [#allocation3], %s13
      %s15 = sshll.u32 [#allocation2], 4
      %s16 = int_to_ptr.vmem [resolvable:$true] %s15
      %21 = dma.hbm_to_vmem [thread:$0]  %s0, 256, %s16, [#allocation3], 128, 128, 8
    $region5: #{tpu_custom_call.1} parent=1 // pred_fallthru
      _
    // Predicated region
    $region6: #{tpu_custom_call.1} parent=1 // pred_check
      _
    $region7: #{tpu_custom_call.1} parent=1 // pred_check_branch
      %23 = sbr.rel (0) target = $region9
    $region8: #{tpu_custom_call.1} parent=1 // pred_region
      %s25 = ssub.s32 256, 256
      %26 = vsyncadd [#allocation6], %s25
      %s27 = sshll.u32 [#allocation5], 4
      %s28 = int_to_ptr.vmem [resolvable:$true] %s27
      %33 = dma.hbm_to_vmem [thread:$0]  %s1, 256, %s28, [#allocation6], 128, 128, 8
    $region9: #{tpu_custom_call.1} parent=1 // pred_fallthru
      _
    // Predicated region
    $region10: #{tpu_custom_call.1} parent=1 // pred_check
      _
    $region11: #{tpu_custom_call.1} parent=1 // pred_check_branch
      %35 = sbr.rel (0) target = $region13
    $region12: #{tpu_custom_call.1} parent=1 // pred_region
      %36 = dma.done [#allocation3], 256
    $region13: #{tpu_custom_call.1} parent=1 // pred_fallthru
      _
    // Predicated region
    $region14: #{tpu_custom_call.1} parent=1 // pred_check
      _
    $region15: #{tpu_custom_call.1} parent=1 // pred_check_branch
      %38 = sbr.rel (0) target = $region17
    $region16: #{tpu_custom_call.1} parent=1 // pred_region
      %39 = dma.done [#allocation6], 256
    $region17: #{tpu_custom_call.1} parent=1 // pred_fallthru
      _
    %p40 = scmp.eq.s32.totalorder 0, 0
    // Predicated region
    $region18: #{tpu_custom_call.1} parent=1 // pred_check
      %p41 = pneg %p40
    $region19: #{tpu_custom_call.1} parent=1 // pred_check_branch
      %43 = sbr.rel (%p41) target = $region21
    $region20: #{tpu_custom_call.1} parent=1 // pred_region
      %44 = vst [vmem:[#allocation7] sm:$0xff] 0.0
    $region21: #{tpu_custom_call.1} parent=1 // pred_fallthru
      _
    %v45 = vld [vmem:[#allocation2] sm:$0xff]
    %v46 = vld [vmem:[#allocation2 + $0x8] sm:$0xff]
    %v47 = vld [vmem:[#allocation5] sm:$0xff]
    %v48 = vld [vmem:[#allocation5 + $0x8] sm:$0xff]
    %v49 = vand.u32 2147483647, %v47
    %v50 = vand.u32 2147483647, %v48
    %v51 = vadd.f32 %v49, 0.01
    %v52 = vadd.f32 %v50, 0.01
    %v53 = vrcp.pop %v51
    %v54 = vrcp.pop %v52
    %v55 = vsub.f32 %v45, %v47
    %v56 = vsub.f32 %v46, %v48
    %v57 = vand.u32 2147483647, %v55
    %v58 = vand.u32 2147483647, %v56
    %v59 = vmul.f32 %v57, %v53
    %v60 = vmul.f32 %v58, %v54
    %v61 = vld [vmem:[#allocation7] sm:$0xff]
    %v62 = vadd.f32 %v59, %v60
    %v63 = vadd.f32 %v61, %v62
    %64 = vst [vmem:[#allocation7] sm:$0xff] %v63
    // Predicated region
    $region22: #{tpu_custom_call.1} parent=1 // pred_check
      _
    $region23: #{tpu_custom_call.1} parent=1 // pred_check_branch
      %66 = sbr.rel (0) target = $region25
    $region24: #{tpu_custom_call.1} parent=1 // pred_region
      %s68 = ssub.s32 128, 128
      %69 = vsyncadd [#allocation4], %s68
      %s71 = sshll.u32 [#allocation7], 4
      %s72 = int_to_ptr.vmem [resolvable:$true] %s71
      %74 = dma.vmem_to_hbm [thread:$0]  %s72, 128, %s2, [#allocation4]
    $region25: #{tpu_custom_call.1} parent=1 // pred_fallthru
      _
    // Predicated region
    $region26: #{tpu_custom_call.1} parent=1 // pred_check
      _
    $region27: #{tpu_custom_call.1} parent=1 // pred_check_branch
      %76 = sbr.rel (0) target = $region29
    $region28: #{tpu_custom_call.1} parent=1 // pred_region
      %77 = dma.done [#allocation4], 128
    $region29: #{tpu_custom_call.1} parent=1 // pred_fallthru
      _
    %78 = vsyncpa [#allocation3], 1
    %79 = vsyncpa [#allocation6], 1
    %80 = vsyncpa [#allocation4], 1

</llo_original>
